<compile_context>
chip_gen: v7x
topology: tpu7x:2x2x1
jax: 0.10.0
libtpu: 0.0.40
codegen_flags: <defaults>
</compile_context>

<pallas_src>
import functools

import jax
import jax.numpy as jnp
from jax.experimental import pallas as pl
from jax.experimental.pallas import tpu as pltpu

OUT_LANES = 128          # lane-dense (8,128) accumulator block
OUT_SUBS = 8

_TILE_N_CAP = 32768            # max samples (lanes) per grid step
_INPUT_VMEM_BUDGET = 8 << 20   # double-buffered input bytes (fits v5e 16 MiB scoped)


def _num_tensorcores_per_chip():
    """2 on v7x (two TensorCores per chip), 1 on v5e/v6e (single TC)."""
    try:
        kind = jax.devices()[0].device_kind.lower()
    except Exception:
        return 1
    return 2 if ("v7" in kind or "7x" in kind) else 1


def _eg_ce_kernel(pred_ref, target_ref, out_ref, *, inv_bin_size, alpha,
                  bin_number, n_valid, tile_n, steps, is_360):
    shard = pl.program_id(0)   # parallel shard (TensorCore on v7x)
    i = pl.program_id(1)       # reduction ("arbitrary") axis over sample tiles

    @pl.when(i == 0)
    def _():
        out_ref[...] = jnp.zeros_like(out_ref)

    p = pred_ref[...].astype(jnp.float32)      # (C, tile_n)   lane-dense
    t = target_ref[...].astype(jnp.float32)    # (1, tile_n)

    nb = float(bin_number)

    # trueLabel = target // binSize  (constant-multiply + floor, no divide).
    u = t * inv_bin_size
    true_f = jnp.floor(u)                                       # (1, tile_n)
    # Wraparound neighbours via compare+select (no float mod); exact for
    # targets in [0, range), which is the module's domain.
    right_f = jnp.where(true_f == nb - 1.0, 0.0, true_f + 1.0)
    left_f = jnp.where(true_f == 0.0, nb - 1.0, true_f - 1.0)

    # weight = exp(-alpha * distance / binSize) = exp(-alpha * frac(u))
    weight = jnp.exp(-alpha * (u - true_f))                     # (1, tile_n)

    # Per-sample logsumexp over the class (sublane) axis.
    m = jnp.max(p, axis=0, keepdims=True)                       # (1, tile_n)
    se = jnp.sum(jnp.exp(p - m), axis=0, keepdims=True)         # (1, tile_n)
    lse = m + jnp.log(se)                                       # (1, tile_n)

    # Label picks.  Only their batch sums are needed, so each pick is a
    # FULL-array reduction of a masked copy of the block: the accumulation is
    # elementwise (VPU) with a single tiny cross-lane/sublane tail, instead of
    # per-sample cross-lane reductions (XLU).  Padded tail columns of `p` are
    # exact zeros (wrapper jnp.pad), so no validity mask is needed here.
    row = jax.lax.broadcasted_iota(jnp.int32, p.shape, 0)       # class index
    tl = true_f.astype(jnp.int32)
    rl = right_f.astype(jnp.int32)
    ll = left_f.astype(jnp.int32)
    s_pick_t = jnp.sum(jnp.where(row == tl, p, 0.0))
    s_pick_r = jnp.sum(jnp.where(row == rl, p, 0.0))
    s_pick_l = jnp.sum(jnp.where(row == ll, p, 0.0))

    if is_360:
        w_r = weight
        w_l = 1.0 - weight
    else:
        # NOTE: matches the PyTorch module literally (continuous target
        # compared against 0 and binNumber-1).
        not_smallest = (t != 0.0).astype(jnp.float32)
        not_largest = (t != nb - 1.0).astype(jnp.float32)
        w_r = not_largest * weight
        w_l = not_smallest * (1.0 - weight)

    # Per-sample validity mask (only the tail block of each shard is padded).
    col0 = (shard * steps + i) * tile_n
    col = jax.lax.broadcasted_iota(jnp.int32, t.shape, 1) + col0
    valid = (col < n_valid).astype(jnp.float32)                 # (1, tile_n)

    s_lse = jnp.sum(lse * valid)
    s_ce_t = s_lse - s_pick_t
    s_ce_r = s_lse - s_pick_r
    s_ce_l = s_lse - s_pick_l
    s_wr = jnp.sum(w_r * valid)
    s_wl = jnp.sum(w_l * valid)

    # Place the 5 partial sums at (sublane 0, lanes 0..4) of the resident
    # (8,128) block.  This is ~a dozen vreg ops per 16K-32K-sample step
    # (negligible); the block itself is only written back to HBM once.
    lane = jax.lax.broadcasted_iota(jnp.int32, (OUT_SUBS, OUT_LANES), 1)
    sub = jax.lax.broadcasted_iota(jnp.int32, (OUT_SUBS, OUT_LANES), 0)
    first = sub == 0
    blk = (jnp.where(first & (lane == 0), s_ce_t, 0.0)
           + jnp.where(first & (lane == 1), s_ce_r, 0.0)
           + jnp.where(first & (lane == 2), s_ce_l, 0.0)
           + jnp.where(first & (lane == 3), s_wr, 0.0)
           + jnp.where(first & (lane == 4), s_wl, 0.0))
    out_ref[...] += blk


def exponential_geometry_ce_loss(pred, target, range_, alpha, *,
                                 tile_n_cap=_TILE_N_CAP):
    """Pallas implementation of ExponentialGeometryCELoss(range, alpha)(pred, target)."""
    n, num_classes = pred.shape
    assert target.shape == (n,)
    bin_number = num_classes
    bin_size = float(range_) / float(bin_number)
    is_360 = (range_ == 360)

    nsplit = _num_tensorcores_per_chip()

    # Lane-dense presentation: pred as (C, N), target as (1, N).
    pred_t = pred.T
    target2d = target.reshape(1, n)

    # Tile selection: as large as the VMEM budget / cap allow (amortize the
    # ~0.35us per-step overhead, reach HBM roofline), but no larger than
    # needed -> minimal tail padding.
    itemsize_p = pred.dtype.itemsize
    itemsize_t = target.dtype.itemsize
    per_col_bytes = num_classes * itemsize_p + itemsize_t
    tile_cap = max(128, min(int(tile_n_cap),
                            (_INPUT_VMEM_BUDGET // (2 * per_col_bytes)) // 128 * 128))
    cols_per_split = -(-n // nsplit)
    steps = max(1, -(-cols_per_split // tile_cap))
    tile = ((-(-cols_per_split // steps) + 127) // 128) * 128
    n_pad = nsplit * steps * tile
    if n_pad != n:   # zero padding; masked per-sample in-kernel
        pred_t = jnp.pad(pred_t, ((0, 0), (0, n_pad - n)))
        target2d = jnp.pad(target2d, ((0, 0), (0, n_pad - n)))

    # Only raise the scoped-VMEM limit when the (rare) huge-C case needs it.
    vmem_needed = (2 * tile * per_col_bytes
                   + nsplit * OUT_SUBS * OUT_LANES * 4 + (1 << 20))
    vmem_limit = None if vmem_needed <= (12 << 20) else int(vmem_needed)

    if nsplit == 2:
        dims = (pltpu.CORE_PARALLEL, pltpu.ARBITRARY)   # shard across v7x's 2 TCs
    else:
        dims = ("arbitrary", "arbitrary")               # single TC: plain loop

    kernel = functools.partial(
        _eg_ce_kernel,
        inv_bin_size=1.0 / bin_size, alpha=float(alpha), bin_number=bin_number,
        n_valid=n, tile_n=tile, steps=steps, is_360=is_360)

    cost = pl.CostEstimate(
        flops=10 * n * num_classes + 32 * n,
        transcendentals=n * (num_classes + 2),
        bytes_accessed=(n * num_classes * itemsize_p + n * itemsize_t
                        + nsplit * OUT_SUBS * OUT_LANES * 4),
    )

    out = pl.pallas_call(
        kernel,
        out_shape=jax.ShapeDtypeStruct((nsplit * OUT_SUBS, OUT_LANES), jnp.float32),
        grid_spec=pltpu.PrefetchScalarGridSpec(
            num_scalar_prefetch=0,
            grid=(nsplit, steps),
            in_specs=[
                pl.BlockSpec((num_classes, tile), lambda s, i: (0, s * steps + i)),
                pl.BlockSpec((1, tile), lambda s, i: (0, s * steps + i)),
            ],
            out_specs=pl.BlockSpec((OUT_SUBS, OUT_LANES), lambda s, i: (s, 0)),
        ),
        compiler_params=pltpu.CompilerParams(
            dimension_semantics=dims, vmem_limit_bytes=vmem_limit),
        cost_estimate=cost,
    )(pred_t, target2d)

    # Combine per-shard partial sums (only sublane 0, lanes 0..4 are non-zero).
    sums = jnp.sum(out, axis=0)
    inv_n = 1.0 / float(n)
    ce_t = sums[0] * inv_n
    ce_r = sums[1] * inv_n
    ce_l = sums[2] * inv_n
    w_r = sums[3] * inv_n
    w_l = sums[4] * inv_n
    return ce_t + w_r * ce_r + w_l * ce_l


def _eg_ce_ref(pred, target, range_, alpha):
    """Pure-JAX reference mirroring the PyTorch math (CE = mean cross-entropy)."""
    bin_number = pred.shape[1]
    bin_size = range_ / bin_number
    true_label = jnp.floor(target / bin_size)
    left_label = jnp.mod(true_label - 1 + bin_number, bin_number)
    right_label = jnp.mod(true_label + 1, bin_number)
    distance = target - true_label * bin_size
    weight = jnp.exp(-alpha * distance / bin_size)

    lse = jax.scipy.special.logsumexp(pred, axis=1)

    def ce_mean(labels_f):
        lab = labels_f.astype(jnp.int32)
        picked = jnp.take_along_axis(pred, lab[:, None], axis=1)[:, 0]
        return jnp.mean(lse - picked)

    ce_t, ce_r, ce_l = ce_mean(true_label), ce_mean(right_label), ce_mean(left_label)
    if range_ == 360:
        loss = ce_t + weight * ce_r + (1.0 - weight) * ce_l
    else:
        not_smallest = (target != 0).astype(jnp.float32)
        not_largest = (target != bin_number - 1).astype(jnp.float32)
        loss = ce_t + not_largest * weight * ce_r + not_smallest * (1.0 - weight) * ce_l
    return jnp.mean(loss)


if __name__ == "__main__":
    key = jax.random.PRNGKey(0)
    k1, k2, k3, k4 = jax.random.split(key, 4)

    # Angle-bin classification: range=360 degrees, 12 bins, batch 64.
    N, C = 64, 12
    RANGE, ALPHA = 360, 2.0
    pred = jax.random.normal(k1, (N, C), dtype=jnp.float32)
    target = jax.random.uniform(k2, (N,), dtype=jnp.float32,
                                minval=0.0, maxval=float(RANGE) - 1e-3)

    loss = jax.block_until_ready(exponential_geometry_ce_loss(pred, target, RANGE, ALPHA))
    ref = _eg_ce_ref(pred, target, RANGE, ALPHA)
    assert jnp.allclose(loss, ref, rtol=1e-5, atol=1e-5), (loss, ref)

    # Non-360 branch (guarded left/right CE terms); also exercises tail padding.
    RANGE2, ALPHA2 = 100, 1.0
    N2, C2 = 40, 10
    pred2 = jax.random.normal(k3, (N2, C2), dtype=jnp.float32)
    target2 = jax.random.uniform(k4, (N2,), dtype=jnp.float32,
                                 minval=0.0, maxval=float(RANGE2) - 1e-3)

    loss2 = jax.block_until_ready(exponential_geometry_ce_loss(pred2, target2, RANGE2, ALPHA2))
    ref2 = _eg_ce_ref(pred2, target2, RANGE2, ALPHA2)
    assert jnp.allclose(loss2, ref2, rtol=1e-5, atol=1e-5), (loss2, ref2)

    print("KERNEL_OK")
</pallas_src>

<mosaic_0001>
module attributes {stable_mosaic.version = 11 : i64} {
  func.func @_eg_ce_kernel(%arg0: i32, %arg1: i32, %arg2: memref<12x128xf32, #tpu.memory_space<vmem>>, %arg3: memref<1x128xf32, #tpu.memory_space<vmem>>, %arg4: memref<8x128xf32, #tpu.memory_space<vmem>>) attributes {dimension_semantics = [#tpu.dimension_semantics<arbitrary>, #tpu.dimension_semantics<arbitrary>], iteration_bounds = array<i64: 1, 1>, scalar_prefetch = 0 : i64, scratch_operands = 0 : i64, tpu.core_type = #tpu.core_type<tc>, window_params = [{transform_indices = @transform_0, window_bounds = array<i64: 12, 128>}, {transform_indices = @transform_1, window_bounds = array<i64: 1, 128>}, {transform_indices = @transform_2, window_bounds = array<i64: 8, 128>}]} {
    %c0_i32 = arith.constant 0 : i32
    %0 = arith.cmpi eq, %arg1, %c0_i32 : i32
    %1 = arith.extui %0 : i1 to i32
    %c0_i32_0 = arith.constant 0 : i32
    %2 = arith.cmpi ne, %1, %c0_i32_0 : i32
    scf.if %2 {
      %cst_35 = arith.constant 0.000000e+00 : f32
      %132 = vector.broadcast %cst_35 : f32 to vector<8x128xf32>
      %c0_36 = arith.constant 0 : index
      %c0_37 = arith.constant 0 : index
      %133 = vector.load %arg4[%c0_36, %c0_37] : memref<8x128xf32, #tpu.memory_space<vmem>>, vector<8x128xf32>
      tpu.vector_store %arg4[%c0_36, %c0_37], %132 {strides = array<i32>} : memref<8x128xf32, #tpu.memory_space<vmem>>, vector<8x128xf32>,
    } else {
    }
    %c0 = arith.constant 0 : index
    %c0_1 = arith.constant 0 : index
    %3 = vector.load %arg2[%c0, %c0_1] : memref<12x128xf32, #tpu.memory_space<vmem>>, vector<12x128xf32>
    %c0_2 = arith.constant 0 : index
    %c0_3 = arith.constant 0 : index
    %4 = vector.load %arg3[%c0_2, %c0_3] : memref<1x128xf32, #tpu.memory_space<vmem>>, vector<1x128xf32>
    %cst = arith.constant 0.0333333351 : f32
    %5 = vector.broadcast %cst : f32 to vector<1x128xf32>
    %6 = arith.mulf %4, %5 : vector<1x128xf32>
    %7 = math.floor %6 : vector<1x128xf32>
    %cst_4 = arith.constant 1.100000e+01 : f32
    %8 = vector.broadcast %cst_4 : f32 to vector<1x128xf32>
    %9 = arith.cmpf oeq, %7, %8 : vector<1x128xf32>
    %cst_5 = arith.constant 1.000000e+00 : f32
    %10 = vector.broadcast %cst_5 : f32 to vector<1x128xf32>
    %11 = arith.addf %7, %10 : vector<1x128xf32>
    %cst_6 = arith.constant 0.000000e+00 : f32
    %12 = vector.broadcast %cst_6 : f32 to vector<1x128xf32>
    %13 = arith.select %9, %12, %11 : vector<1x128xi1>, vector<1x128xf32>
    %cst_7 = arith.constant 0.000000e+00 : f32
    %14 = vector.broadcast %cst_7 : f32 to vector<1x128xf32>
    %15 = arith.cmpf oeq, %7, %14 : vector<1x128xf32>
    %cst_8 = arith.constant 1.000000e+00 : f32
    %16 = vector.broadcast %cst_8 : f32 to vector<1x128xf32>
    %17 = arith.subf %7, %16 : vector<1x128xf32>
    %cst_9 = arith.constant 1.100000e+01 : f32
    %18 = vector.broadcast %cst_9 : f32 to vector<1x128xf32>
    %19 = arith.select %15, %18, %17 : vector<1x128xi1>, vector<1x128xf32>
    %20 = arith.subf %6, %7 : vector<1x128xf32>
    %cst_10 = arith.constant -2.000000e+00 : f32
    %21 = vector.broadcast %cst_10 : f32 to vector<1x128xf32>
    %22 = arith.mulf %21, %20 : vector<1x128xf32>
    %23 = math.exp %22 : vector<1x128xf32>
    %cst_11 = arith.constant dense<0xFF800000> : vector<128xf32>
    %24 = vector.multi_reduction <maximumf>, %3, %cst_11 [0] : vector<12x128xf32> to vector<128xf32>
    %25 = vector.shape_cast %24 : vector<128xf32> to vector<1x128xf32>
    %26 = vector.broadcast %25 : vector<1x128xf32> to vector<12x128xf32>
    %27 = arith.subf %3, %26 : vector<12x128xf32>
    %28 = math.exp %27 : vector<12x128xf32>
    %cst_12 = arith.constant dense<0.000000e+00> : vector<128xf32>
    %29 = vector.multi_reduction <add>, %28, %cst_12 [0] : vector<12x128xf32> to vector<128xf32>
    %30 = vector.shape_cast %29 : vector<128xf32> to vector<1x128xf32>
    %31 = math.log %30 : vector<1x128xf32>
    %32 = arith.addf %25, %31 : vector<1x128xf32>
    %33 = tpu.iota {dimensions = array<i32: 0>} : vector<12x128xi32>
    %34 = arith.fptosi %7 : vector<1x128xf32> to vector<1x128xi32>
    %35 = arith.fptosi %13 : vector<1x128xf32> to vector<1x128xi32>
    %36 = arith.fptosi %19 : vector<1x128xf32> to vector<1x128xi32>
    %37 = vector.broadcast %34 : vector<1x128xi32> to vector<12x128xi32>
    %38 = arith.cmpi eq, %33, %37 : vector<12x128xi32>
    %cst_13 = arith.constant 0.000000e+00 : f32
    %39 = vector.broadcast %cst_13 : f32 to vector<12x128xf32>
    %40 = arith.select %38, %3, %39 : vector<12x128xi1>, vector<12x128xf32>
    %41 = vector.shape_cast %40 : vector<12x128xf32> to vector<1x12x128xf32>
    %cst_14 = arith.constant dense<0.000000e+00> : vector<1xf32>
    %42 = vector.multi_reduction <add>, %41, %cst_14 [1, 2] : vector<1x12x128xf32> to vector<1xf32>
    %43 = vector.shape_cast %42 : vector<1xf32> to vector<1x1x1xf32>
    %44 = vector.extract %43[0, 0, 0] : f32 from vector<1x1x1xf32>
    %45 = vector.broadcast %35 : vector<1x128xi32> to vector<12x128xi32>
    %46 = arith.cmpi eq, %33, %45 : vector<12x128xi32>
    %cst_15 = arith.constant 0.000000e+00 : f32
    %47 = vector.broadcast %cst_15 : f32 to vector<12x128xf32>
    %48 = arith.select %46, %3, %47 : vector<12x128xi1>, vector<12x128xf32>
    %49 = vector.shape_cast %48 : vector<12x128xf32> to vector<1x12x128xf32>
    %cst_16 = arith.constant dense<0.000000e+00> : vector<1xf32>
    %50 = vector.multi_reduction <add>, %49, %cst_16 [1, 2] : vector<1x12x128xf32> to vector<1xf32>
    %51 = vector.shape_cast %50 : vector<1xf32> to vector<1x1x1xf32>
    %52 = vector.extract %51[0, 0, 0] : f32 from vector<1x1x1xf32>
    %53 = vector.broadcast %36 : vector<1x128xi32> to vector<12x128xi32>
    %54 = arith.cmpi eq, %33, %53 : vector<12x128xi32>
    %cst_17 = arith.constant 0.000000e+00 : f32
    %55 = vector.broadcast %cst_17 : f32 to vector<12x128xf32>
    %56 = arith.select %54, %3, %55 : vector<12x128xi1>, vector<12x128xf32>
    %57 = vector.shape_cast %56 : vector<12x128xf32> to vector<1x12x128xf32>
    %cst_18 = arith.constant dense<0.000000e+00> : vector<1xf32>
    %58 = vector.multi_reduction <add>, %57, %cst_18 [1, 2] : vector<1x12x128xf32> to vector<1xf32>
    %59 = vector.shape_cast %58 : vector<1xf32> to vector<1x1x1xf32>
    %60 = vector.extract %59[0, 0, 0] : f32 from vector<1x1x1xf32>
    %cst_19 = arith.constant 1.000000e+00 : f32
    %61 = vector.broadcast %cst_19 : f32 to vector<1x128xf32>
    %62 = arith.subf %61, %23 : vector<1x128xf32>
    %c1_i32 = arith.constant 1 : i32
    %63 = arith.muli %arg0, %c1_i32 : i32
    %64 = arith.addi %63, %arg1 : i32
    %c128_i32 = arith.constant 128 : i32
    %65 = arith.muli %64, %c128_i32 : i32
    %66 = tpu.iota {dimensions = array<i32: 1>} : vector<1x128xi32>
    %67 = vector.broadcast %65 : i32 to vector<1x128xi32>
    %68 = arith.addi %66, %67 : vector<1x128xi32>
    %c64_i32 = arith.constant 64 : i32
    %69 = vector.broadcast %c64_i32 : i32 to vector<1x128xi32>
    %70 = arith.cmpi slt, %68, %69 : vector<1x128xi32>
    %71 = arith.extui %70 : vector<1x128xi1> to vector<1x128xi32>
    %72 = arith.sitofp %71 : vector<1x128xi32> to vector<1x128xf32>
    %73 = arith.mulf %32, %72 : vector<1x128xf32>
    %74 = vector.shape_cast %73 : vector<1x128xf32> to vector<1x1x128xf32>
    %cst_20 = arith.constant dense<0.000000e+00> : vector<1xf32>
    %75 = vector.multi_reduction <add>, %74, %cst_20 [1, 2] : vector<1x1x128xf32> to vector<1xf32>
    %76 = vector.shape_cast %75 : vector<1xf32> to vector<1x1x1xf32>
    %77 = vector.extract %76[0, 0, 0] : f32 from vector<1x1x1xf32>
    %78 = arith.subf %77, %44 : f32
    %79 = arith.subf %77, %52 : f32
    %80 = arith.subf %77, %60 : f32
    %81 = arith.mulf %23, %72 : vector<1x128xf32>
    %82 = vector.shape_cast %81 : vector<1x128xf32> to vector<1x1x128xf32>
    %cst_21 = arith.constant dense<0.000000e+00> : vector<1xf32>
    %83 = vector.multi_reduction <add>, %82, %cst_21 [1, 2] : vector<1x1x128xf32> to vector<1xf32>
    %84 = vector.shape_cast %83 : vector<1xf32> to vector<1x1x1xf32>
    %85 = vector.extract %84[0, 0, 0] : f32 from vector<1x1x1xf32>
    %86 = arith.mulf %62, %72 : vector<1x128xf32>
    %87 = vector.shape_cast %86 : vector<1x128xf32> to vector<1x1x128xf32>
    %cst_22 = arith.constant dense<0.000000e+00> : vector<1xf32>
    %88 = vector.multi_reduction <add>, %87, %cst_22 [1, 2] : vector<1x1x128xf32> to vector<1xf32>
    %89 = vector.shape_cast %88 : vector<1xf32> to vector<1x1x1xf32>
    %90 = vector.extract %89[0, 0, 0] : f32 from vector<1x1x1xf32>
    %91 = tpu.iota {dimensions = array<i32: 1>} : vector<8x128xi32>
    %92 = tpu.iota {dimensions = array<i32: 0>} : vector<8x128xi32>
    %c0_i32_23 = arith.constant 0 : i32
    %93 = vector.broadcast %c0_i32_23 : i32 to vector<8x128xi32>
    %94 = arith.cmpi eq, %92, %93 : vector<8x128xi32>
    %c0_i32_24 = arith.constant 0 : i32
    %95 = vector.broadcast %c0_i32_24 : i32 to vector<8x128xi32>
    %96 = arith.cmpi eq, %91, %95 : vector<8x128xi32>
    %97 = arith.andi %94, %96 : vector<8x128xi1>
    %cst_25 = arith.constant 0.000000e+00 : f32
    %98 = vector.broadcast %78 : f32 to vector<8x128xf32>
    %99 = vector.broadcast %cst_25 : f32 to vector<8x128xf32>
    %100 = arith.select %97, %98, %99 : vector<8x128xi1>, vector<8x128xf32>
    %c1_i32_26 = arith.constant 1 : i32
    %101 = vector.broadcast %c1_i32_26 : i32 to vector<8x128xi32>
    %102 = arith.cmpi eq, %91, %101 : vector<8x128xi32>
    %103 = arith.andi %94, %102 : vector<8x128xi1>
    %cst_27 = arith.constant 0.000000e+00 : f32
    %104 = vector.broadcast %79 : f32 to vector<8x128xf32>
    %105 = vector.broadcast %cst_27 : f32 to vector<8x128xf32>
    %106 = arith.select %103, %104, %105 : vector<8x128xi1>, vector<8x128xf32>
    %107 = arith.addf %100, %106 : vector<8x128xf32>
    %c2_i32 = arith.constant 2 : i32
    %108 = vector.broadcast %c2_i32 : i32 to vector<8x128xi32>
    %109 = arith.cmpi eq, %91, %108 : vector<8x128xi32>
    %110 = arith.andi %94, %109 : vector<8x128xi1>
    %cst_28 = arith.constant 0.000000e+00 : f32
    %111 = vector.broadcast %80 : f32 to vector<8x128xf32>
    %112 = vector.broadcast %cst_28 : f32 to vector<8x128xf32>
    %113 = arith.select %110, %111, %112 : vector<8x128xi1>, vector<8x128xf32>
    %114 = arith.addf %107, %113 : vector<8x128xf32>
    %c3_i32 = arith.constant 3 : i32
    %115 = vector.broadcast %c3_i32 : i32 to vector<8x128xi32>
    %116 = arith.cmpi eq, %91, %115 : vector<8x128xi32>
    %117 = arith.andi %94, %116 : vector<8x128xi1>
    %cst_29 = arith.constant 0.000000e+00 : f32
    %118 = vector.broadcast %85 : f32 to vector<8x128xf32>
    %119 = vector.broadcast %cst_29 : f32 to vector<8x128xf32>
    %120 = arith.select %117, %118, %119 : vector<8x128xi1>, vector<8x128xf32>
    %121 = arith.addf %114, %120 : vector<8x128xf32>
    %c4_i32 = arith.constant 4 : i32
    %122 = vector.broadcast %c4_i32 : i32 to vector<8x128xi32>
    %123 = arith.cmpi eq, %91, %122 : vector<8x128xi32>
    %124 = arith.andi %94, %123 : vector<8x128xi1>
    %cst_30 = arith.constant 0.000000e+00 : f32
    %125 = vector.broadcast %90 : f32 to vector<8x128xf32>
    %126 = vector.broadcast %cst_30 : f32 to vector<8x128xf32>
    %127 = arith.select %124, %125, %126 : vector<8x128xi1>, vector<8x128xf32>
    %128 = arith.addf %121, %127 : vector<8x128xf32>
    %c0_31 = arith.constant 0 : index
    %c0_32 = arith.constant 0 : index
    %129 = vector.load %arg4[%c0_31, %c0_32] : memref<8x128xf32, #tpu.memory_space<vmem>>, vector<8x128xf32>
    %130 = arith.addf %129, %128 : vector<8x128xf32>
    %c0_33 = arith.constant 0 : index
    %c0_34 = arith.constant 0 : index
    %131 = vector.load %arg4[%c0_33, %c0_34] : memref<8x128xf32, #tpu.memory_space<vmem>>, vector<8x128xf32>
    tpu.vector_store %arg4[%c0_33, %c0_34], %130 {strides = array<i32>} : memref<8x128xf32, #tpu.memory_space<vmem>>, vector<8x128xf32>,
    return
  }
  func.func @transform_0(%arg0: i32, %arg1: i32) -> (i32, i32) {
    %c1_i32 = arith.constant 1 : i32
    %0 = arith.muli %arg0, %c1_i32 : i32
    %1 = arith.addi %0, %arg1 : i32
    %c0_i32 = arith.constant 0 : i32
    %c0_i32_0 = arith.constant 0 : i32
    return %c0_i32, %1 : i32, i32
  }
  func.func @transform_1(%arg0: i32, %arg1: i32) -> (i32, i32) {
    %c1_i32 = arith.constant 1 : i32
    %0 = arith.muli %arg0, %c1_i32 : i32
    %1 = arith.addi %0, %arg1 : i32
    %c0_i32 = arith.constant 0 : i32
    %c0_i32_0 = arith.constant 0 : i32
    return %c0_i32, %1 : i32, i32
  }
  func.func @transform_2(%arg0: i32, %arg1: i32) -> (i32, i32) {
    %c0_i32 = arith.constant 0 : i32
    %c0_i32_0 = arith.constant 0 : i32
    return %arg0, %c0_i32 : i32, i32
  }
}

</mosaic_0001>

<llo_original>
// kernel: tpu_custom_call.1
$region0: #{tpu_custom_call.1}
  #allocation0 [shape = 'u32[]', space=smem, size = 0x4, offset = 0x4, fixed_abs, tag = 'smem constant byte address 0x4 - core index']
  #allocation1 [shape = 'u32[144,128]{1,0:T(1,128)}', space=vmem, size = 0x12000, scoped, tag = 'internal scratch']
  %s0 = inlined_call_operand.hbm [shape: f32[12,128], index: 0, kind: input, shape index: {}]
  %s1 = inlined_call_operand.vmem [shape: f32[1,128], index: 1, kind: input, shape index: {}]
  %s2 = inlined_call_operand.hbm [shape: f32[8,128], index: 2, kind: output, shape index: {}]
  %s3 = sld [smem:[#allocation0]]
  $region26: #{tpu_custom_call.1} parent=0
    _
  %s5 = ssub.s32 1, %s3
  %s6 = scalar_select 0, %s5, %s3
  $region1: #{tpu_custom_call.1} parent=0
    #allocation2 [shape = 'u8[8192]{0}', space=vmem, size = 0x2000, scoped, tag = 'input window, operand 0, single buffered']
    #allocation3 [shape = 's32[1]{0}', space=sflag, size = 0x4, scoped, tag = 'scoped memory for tpu_custom_call.1']
    #allocation4 [shape = 's32[1]{0}', space=sflag, size = 0x4, scoped, tag = 'scoped memory for tpu_custom_call.1']
    #allocation5 [shape = 'u8[4096]{0}', space=vmem, size = 0x1000, scoped, tag = 'output window, operand 0, single buffered']
    %7 = vsyncpa [#allocation3], 0
    %8 = vsyncpa [#allocation4], 0
    // Predicated region
    $region2: #{tpu_custom_call.1} parent=1 // pred_check
      _
    $region3: #{tpu_custom_call.1} parent=1 // pred_check_branch
      %10 = sbr.rel (0) target = $region5
    $region4: #{tpu_custom_call.1} parent=1 // pred_region
      %s11 = sadd.s32 0, 0
      %s13 = ssub.s32 256, 256
      %14 = vsyncadd [#allocation3], %s13
      %s15 = smul.addr %s11, 128
      %s16 = scalar_lea.hbm %s0, %s15
      %s17 = sshll.u32 [#allocation2], 4
      %s18 = int_to_ptr.vmem [resolvable:$true] %s17
      %23 = dma.hbm_to_vmem [thread:$0]  %s16, 256, %s18, [#allocation3], 128, 128, 8
    $region5: #{tpu_custom_call.1} parent=1 // pred_fallthru
      _
    // Predicated region
    $region6: #{tpu_custom_call.1} parent=1 // pred_check
      _
    $region7: #{tpu_custom_call.1} parent=1 // pred_check_branch
      %25 = sbr.rel (0) target = $region9
    $region8: #{tpu_custom_call.1} parent=1 // pred_region
      %s26 = sadd.s32 0, 0
      %p27 = scmp.lt.s32.totalorder %s26, 0
      %s28 = scalar_select %p27, %s26, 0
      %s29 = scalar_lea.vmem %s1, %s28
      %s30 = sadd.s32 0, 0
    $region9: #{tpu_custom_call.1} parent=1 // pred_fallthru
      _
    // Predicated region
    $region10: #{tpu_custom_call.1} parent=1 // pred_check
      _
    $region11: #{tpu_custom_call.1} parent=1 // pred_check_branch
      %32 = sbr.rel (0) target = $region13
    $region12: #{tpu_custom_call.1} parent=1 // pred_region
      %33 = dma.done [#allocation3], 256
    $region13: #{tpu_custom_call.1} parent=1 // pred_fallthru
      _
    %s34 = sadd.s32 0, 0
    %p35 = scmp.lt.s32.totalorder %s34, 0
    %s36 = scalar_select %p35, %s34, 0
    %s37 = scalar_lea.vmem %s1, %s36
    %s38 = sadd.s32 0, 0
    %s39 = sadd.s32 0, 0
    %p40 = scmp.lt.s32.totalorder %s39, 0
    %s41 = scalar_select %p40, %s39, 0
    %s42 = scalar_lea.vmem %s1, %s41
    %s43 = sadd.s32 0, 0
    %p44 = scmp.eq.s32.totalorder 0, 0
    // Predicated region
    $region14: #{tpu_custom_call.1} parent=1 // pred_check
      %p45 = pneg %p44
    $region15: #{tpu_custom_call.1} parent=1 // pred_check_branch
      %47 = sbr.rel (%p45) target = $region17
    $region16: #{tpu_custom_call.1} parent=1 // pred_region
      %48 = vst [vmem:[#allocation5] sm:$0xff] 0.0
    $region17: #{tpu_custom_call.1} parent=1 // pred_fallthru
      _
    %v49 = vld [vmem:[#allocation2] sm:$0xff]
    %v50 = vld [vmem:[#allocation2 + $0x8] sm:$0xf]
    %v51 = vld [vmem:[%s42] sm:$0x1]
    %v52 = vmul.f32 %v51, 0.033333335
    %v53 = vfloor.f32 %v52
    %vm54 = vcmp.eq.f32.partialorder %v53, 11.0
    %v55 = vadd.f32 %v53, 1.0
    %v56 = vsel %vm54, 0.0, %v55
    %vm57 = vcmp.eq.f32.partialorder %v53, 0.0
    %v58 = vsub.f32 %v53, 1.0
    %v59 = vsel %vm57, 11.0, %v58
    %v60 = vsub.f32 %v52, %v53
    %v61 = vmul.f32 %v60, -2.0
    %v62 = vmul.f32 %v61, 1.442695
    %v63 = vpow.pop %v62
    %vm64 = vcmask 1043456
    %v65 = vsel %vm64, %v50, -inf
    %v66 = vmax.f32 %v49, %v65
    %v67 = vrot.slane %v66, 4
    %v68 = vmax.f32 %v66, %v67
    %v69 = vrot.slane %v68, 2
    %v70 = vmax.f32 %v68, %v69
    %v71 = vrot.slane %v70, 1
    %v72 = vmax.f32 %v70, %v71
    %v73 = vsub.f32 %v49, %v72
    %v74 = vsub.f32 %v50, %v72
    %v75 = vmul.f32 %v73, 1.442695
    %v76 = vpow.pop %v75
    %v77 = vmul.f32 %v74, 1.442695
    %v78 = vpow.pop %v77
    %v79 = vsel %vm64, %v78, 0.0
    %v80 = vadd.f32 %v76, %v79
    %v81 = vrot.slane %v80, 4
    %v82 = vadd.f32 %v80, %v81
    %v83 = vrot.slane %v82, 2
    %v84 = vadd.f32 %v82, %v83
    %v85 = vrot.slane %v84, 1
    %v86 = vadd.f32 %v84, %v85
    %v87 = vlog2.pop %v86
    %v88 = vmul.f32 %v87, 0.6931472
    %v89 = vadd.f32 %v72, %v88
    %v90 = vlaneseq
    %v91 = vshrl.u32 %v90, 7
    %v92 = vadd.s32 %v91, 8
    %v93 = vcvt.f32.s32.to.zero.pseudo %v53
    %v94 = vcvt.f32.s32.to.zero.pseudo %v56
    %v95 = vcvt.f32.s32.to.zero.pseudo %v59
    %v96 = vlaneseq
    %v97 = vshrl.u32 %v96, 7
    %v98 = vsub.s32 0, %v97
    %v99 = vrot.slane %v93, %v98
    %vm100 = vcmp.eq.s32.totalorder %v91, %v99
    %vm101 = vcmp.eq.s32.totalorder %v92, %v99
    %v102 = vsel %vm100, %v49, 0.0
    %v103 = vsel %vm101, %v50, 0.0
    %v104 = vsel %vm64, %v103, 0.0
    %v105 = vadd.f32 %v102, %v104
    %106 = vadd.xlane.f32.xlu0 %v105
    %v107 = vpop.xlane.xlu0 %106
    %v108 = vrot.slane %v107, 4
    %v109 = vadd.f32 %v107, %v108
    %v110 = vrot.slane %v109, 2
    %v111 = vadd.f32 %v109, %v110
    %v112 = vrot.slane %v111, 1
    %v113 = vadd.f32 %v111, %v112
    %s114 = vtos %v113
    %v115 = vlaneseq
    %v116 = vshrl.u32 %v115, 7
    %v117 = vsub.s32 0, %v116
    %v118 = vrot.slane %v94, %v117
    %vm119 = vcmp.eq.s32.totalorder %v91, %v118
    %vm120 = vcmp.eq.s32.totalorder %v92, %v118
    %v121 = vsel %vm119, %v49, 0.0
    %v122 = vsel %vm120, %v50, 0.0
    %v123 = vsel %vm64, %v122, 0.0
    %v124 = vadd.f32 %v121, %v123
    %125 = vadd.xlane.f32.xlu0 %v124
    %v126 = vpop.xlane.xlu0 %125
    %v127 = vrot.slane %v126, 4
    %v128 = vadd.f32 %v126, %v127
    %v129 = vrot.slane %v128, 2
    %v130 = vadd.f32 %v128, %v129
    %v131 = vrot.slane %v130, 1
    %v132 = vadd.f32 %v130, %v131
    %s133 = vtos %v132
    %v134 = vlaneseq
    %v135 = vshrl.u32 %v134, 7
    %v136 = vsub.s32 0, %v135
    %v137 = vrot.slane %v95, %v136
    %vm138 = vcmp.eq.s32.totalorder %v91, %v137
    %vm139 = vcmp.eq.s32.totalorder %v92, %v137
    %v140 = vsel %vm138, %v49, 0.0
    %v141 = vsel %vm139, %v50, 0.0
    %v142 = vsel %vm64, %v141, 0.0
    %v143 = vadd.f32 %v140, %v142
    %144 = vadd.xlane.f32.xlu0 %v143
    %v145 = vpop.xlane.xlu0 %144
    %v146 = vrot.slane %v145, 4
    %v147 = vadd.f32 %v145, %v146
    %v148 = vrot.slane %v147, 2
    %v149 = vadd.f32 %v147, %v148
    %v150 = vrot.slane %v149, 1
    %v151 = vadd.f32 %v149, %v150
    %s152 = vtos %v151
    %v153 = vsub.f32 1.0, %v63
    %s154 = sadd.s32 0, 0
    %s155 = smul.u32 %s154, 128
    %v156 = vlaneseq
    %v157 = vand.u32 %v156, 127
    %v158 = vstv %s155
    %v159 = vadd.s32 %v157, %v158
    %vm160 = vcmp.lt.s32.totalorder %v159, 64
    %v161 = vsel %vm160, 1, 0
    %v162 = vcvt.s32.f32 %v161
    %v163 = vmul.f32 %v89, %v162
    %vm164 = vcmask 1040384
    %v165 = vsel %vm164, %v163, 0.0
    %166 = vadd.xlane.f32.xlu0 %v165
    %v167 = vpop.xlane.xlu0 %166
    %v168 = vrot.slane %v167, 4
    %v169 = vadd.f32 %v167, %v168
    %v170 = vrot.slane %v169, 2
    %v171 = vadd.f32 %v169, %v170
    %v172 = vrot.slane %v171, 1
    %v173 = vadd.f32 %v171, %v172
    %s174 = vtos %v173
    %s175 = ssub.f32 %s174, %s114
    %s176 = ssub.f32 %s174, %s133
    %s177 = ssub.f32 %s174, %s152
    %v178 = vmul.f32 %v63, %v162
    %v179 = vsel %vm164, %v178, 0.0
    %180 = vadd.xlane.f32.xlu0 %v179
    %v181 = vpop.xlane.xlu0 %180
    %v182 = vrot.slane %v181, 4
    %v183 = vadd.f32 %v181, %v182
    %v184 = vrot.slane %v183, 2
    %v185 = vadd.f32 %v183, %v184
    %v186 = vrot.slane %v185, 1
    %v187 = vadd.f32 %v185, %v186
    %s188 = vtos %v187
    %v189 = vmul.f32 %v153, %v162
    %v190 = vsel %vm164, %v189, 0.0
    %191 = vadd.xlane.f32.xlu0 %v190
    %v192 = vpop.xlane.xlu0 %191
    %v193 = vrot.slane %v192, 4
    %v194 = vadd.f32 %v192, %v193
    %v195 = vrot.slane %v194, 2
    %v196 = vadd.f32 %v194, %v195
    %v197 = vrot.slane %v196, 1
    %v198 = vadd.f32 %v196, %v197
    %s199 = vtos %v198
    %vm200 = vcmp.eq.s32.totalorder %v91, 0
    %vm201 = vcmp.eq.s32.totalorder %v157, 0
    %vm202 = vmand %vm200, %vm201
    %v203 = vstv %s175
    %v204 = vsel %vm202, %v203, 0.0
    %vm205 = vcmp.eq.s32.totalorder %v157, 1
    %vm206 = vmand %vm200, %vm205
    %v207 = vstv %s176
    %v208 = vsel %vm206, %v207, 0.0
    %v209 = vadd.f32 %v204, %v208
    %vm210 = vcmp.eq.s32.totalorder %v157, 2
    %vm211 = vmand %vm200, %vm210
    %v212 = vstv %s177
    %v213 = vsel %vm211, %v212, 0.0
    %v214 = vadd.f32 %v209, %v213
    %vm215 = vcmp.eq.s32.totalorder %v157, 3
    %vm216 = vmand %vm200, %vm215
    %v217 = vstv %s188
    %v218 = vsel %vm216, %v217, 0.0
    %v219 = vadd.f32 %v214, %v218
    %vm220 = vcmp.eq.s32.totalorder %v157, 4
    %vm221 = vmand %vm200, %vm220
    %v222 = vstv %s199
    %v223 = vsel %vm221, %v222, 0.0
    %v224 = vadd.f32 %v219, %v223
    %v225 = vld [vmem:[#allocation5] sm:$0xff]
    %v226 = vadd.f32 %v225, %v224
    %227 = vst [vmem:[#allocation5] sm:$0xff] %v226
    // Predicated region
    $region18: #{tpu_custom_call.1} parent=1 // pred_check
      _
    $region19: #{tpu_custom_call.1} parent=1 // pred_check_branch
      %229 = sbr.rel (0) target = $region21
    $region20: #{tpu_custom_call.1} parent=1 // pred_region
      %s231 = ssub.s32 128, 128
      %232 = vsyncadd [#allocation4], %s231
      %s234 = sshll.u32 [#allocation5], 4
      %s235 = int_to_ptr.vmem [resolvable:$true] %s234
      %237 = dma.vmem_to_hbm [thread:$0]  %s235, 128, %s2, [#allocation4]
    $region21: #{tpu_custom_call.1} parent=1 // pred_fallthru
      _
    // Predicated region
    $region22: #{tpu_custom_call.1} parent=1 // pred_check
      _
    $region23: #{tpu_custom_call.1} parent=1 // pred_check_branch
      %239 = sbr.rel (0) target = $region25
    $region24: #{tpu_custom_call.1} parent=1 // pred_region
      %240 = dma.done [#allocation4], 128
    $region25: #{tpu_custom_call.1} parent=1 // pred_fallthru
      _
    %241 = vsyncpa [#allocation3], 1
    %242 = vsyncpa [#allocation4], 1

</llo_original>
